<compile_context>
chip_gen: v7x
topology: tpu7x:2x2x1
jax: 0.10.0
libtpu: 0.0.40
codegen_flags: <defaults>
</compile_context>

<pallas_src>
import math

import jax
import jax.numpy as jnp
from jax import lax
from jax.experimental import pallas as pl
from jax.experimental.pallas import tpu as pltpu

_LANES = 128
_SUBLANES = 8
_CHUNK_ROWS = 128  # rows folded into the (8,128) accumulator per inner step


def _round_up(x, m):
    return ((x + m - 1) // m) * m


def _max_tile_rows():
    """Largest row tile that fits the per-generation scoped-VMEM default."""
    try:
        kind = jax.devices()[0].device_kind.lower()
    except Exception:
        kind = ""
    # v2/v3/v4/v5e: 16 MiB scoped-VMEM default -> 4 inputs x 2 bufs x 1 MiB.
    if any(tag in kind for tag in ("v2", "v3", "v4", "v5 lite", "v5lite", "v5e")):
        return 2048
    # v6e / v7x: 32 MiB scoped default -> 4 inputs x 2 bufs x 2 MiB = 16 MiB.
    return 4096


def _make_kernel(tile_rows, total_rows, ragged):
    """Kernel writing a (1, 8, 128) partial sum of squared pairwise diffs."""
    num_chunks = tile_rows // _CHUNK_ROWS

    def kernel(f1_ref, f2_ref, f3_ref, f4_ref, out_ref):
        base_row = pl.program_id(0) * tile_rows

        def body(c, acc):
            start = pl.multiple_of(c * _CHUNK_ROWS, _CHUNK_ROWS)
            rows = pl.ds(start, _CHUNK_ROWS)
            a = f1_ref[rows, :].astype(jnp.float32)
            b = f2_ref[rows, :].astype(jnp.float32)
            cdat = f3_ref[rows, :].astype(jnp.float32)
            d = f4_ref[rows, :].astype(jnp.float32)

            d12 = a - b
            d23 = b - cdat
            d34 = cdat - d
            d41 = d - a
            sq = d12 * d12 + d23 * d23 + d34 * d34 + d41 * d41

            if ragged:
                # Mask rows beyond the true array extent (edge-block reads are
                # undefined and may be NaN -> use where, not a multiply).
                rid = (base_row + c * _CHUNK_ROWS
                       + lax.broadcasted_iota(jnp.int32, sq.shape, 0))
                sq = jnp.where(rid < total_rows, sq, 0.0)

            # Fold the chunk to one vreg with pure VPU adds; the final
            # lane/sublane reduction happens once, outside the kernel.
            folded = jnp.sum(
                sq.reshape(_CHUNK_ROWS // _SUBLANES, _SUBLANES, _LANES), axis=0)
            return acc + folded

        acc0 = jnp.zeros((_SUBLANES, _LANES), jnp.float32)
        acc = lax.fori_loop(0, num_chunks, body, acc0, unroll=True)
        out_ref[...] = acc[None, :, :]

    return kernel


def multi_consist_loss(features):
    """JAX/Pallas equivalent of MultiConsistLoss.forward(features)."""
    f1, f2, f3, f4 = features[0], features[1], features[2], features[3]
    assert f1.shape == f2.shape == f3.shape == f4.shape
    assert f1.dtype == f2.dtype == f3.dtype == f4.dtype

    numel = math.prod(f1.shape)
    itemsize = jnp.dtype(f1.dtype).itemsize

    # Lane-dense flattening: (rows, 128).  Pad (one copy) only if the flat
    # length is not already a multiple of 128; zero pads give zero diffs.
    padded = _round_up(numel, _LANES)
    pad = padded - numel
    rows = padded // _LANES

    max_tile = _max_tile_rows()
    tile_rows = min(max_tile, _round_up(rows, _CHUNK_ROWS))
    grid_n = pl.cdiv(rows, tile_rows)
    ragged = (rows % tile_rows) != 0  # last block hangs over -> mask in kernel

    def _prep(f):
        flat = f.reshape(-1)
        if pad:
            flat = jnp.pad(flat, (0, pad))
        return flat.reshape(rows, _LANES)

    f1r, f2r, f3r, f4r = _prep(f1), _prep(f2), _prep(f3), _prep(f4)

    in_spec = pl.BlockSpec((tile_rows, _LANES), lambda i: (i, 0))
    out_spec = pl.BlockSpec((1, _SUBLANES, _LANES), lambda i: (i, 0, 0))

    partials = pl.pallas_call(
        _make_kernel(tile_rows, rows, ragged),
        out_shape=jax.ShapeDtypeStruct((grid_n, _SUBLANES, _LANES), jnp.float32),
        grid_spec=pltpu.PrefetchScalarGridSpec(
            num_scalar_prefetch=0,
            grid=(grid_n,),
            in_specs=[in_spec, in_spec, in_spec, in_spec],
            out_specs=out_spec,
        ),
        compiler_params=pltpu.CompilerParams(
            dimension_semantics=("parallel",),
        ),
        cost_estimate=pl.CostEstimate(
            flops=12 * numel,
            transcendentals=0,
            bytes_accessed=4 * numel * itemsize + grid_n * _SUBLANES * _LANES * 4,
        ),
    )(f1r, f2r, f3r, f4r)

    # Sum of the four SSDs; divide by 4 * true (unpadded) element count.
    return jnp.sum(partials) / (4.0 * numel)


if __name__ == "__main__":
    key = jax.random.PRNGKey(0)

    def _ref_loss(a, b, c, d):
        mse = lambda x, y: jnp.mean((x - y) ** 2)
        return (mse(a, b) + mse(b, c) + mse(c, d) + mse(d, a)) / 4.0

    # Case 1: small NCHW feature maps (numel already a multiple of 128).
    k1, k2, k3, k4, k5 = jax.random.split(key, 5)
    shape = (2, 4, 16, 16)
    f1 = jax.random.normal(k1, shape, dtype=jnp.float32)
    f2 = jax.random.normal(k2, shape, dtype=jnp.float32)
    f3 = jax.random.normal(k3, shape, dtype=jnp.float32)
    f4 = jax.random.normal(k4, shape, dtype=jnp.float32)
    loss = jax.block_until_ready(multi_consist_loss([f1, f2, f3, f4]))
    expected = _ref_loss(f1, f2, f3, f4)
    assert jnp.allclose(loss, expected, rtol=1e-5, atol=1e-6), (loss, expected)

    # Case 2: unaligned shape (exercises the pad + ragged-tail mask path).
    shape2 = (3, 5, 7, 11)
    g = jax.random.normal(k5, (4,) + shape2, dtype=jnp.float32)
    loss2 = jax.block_until_ready(multi_consist_loss([g[0], g[1], g[2], g[3]]))
    expected2 = _ref_loss(g[0], g[1], g[2], g[3])
    assert jnp.allclose(loss2, expected2, rtol=1e-5, atol=1e-6), (loss2, expected2)

    print("KERNEL_OK")
</pallas_src>

<mosaic_0001>
module attributes {stable_mosaic.version = 11 : i64} {
  func.func @kernel(%arg0: i32, %arg1: memref<128x128xf32, #tpu.memory_space<vmem>>, %arg2: memref<128x128xf32, #tpu.memory_space<vmem>>, %arg3: memref<128x128xf32, #tpu.memory_space<vmem>>, %arg4: memref<128x128xf32, #tpu.memory_space<vmem>>, %arg5: memref<1x8x128xf32, #tpu.memory_space<vmem>>) attributes {dimension_semantics = [#tpu.dimension_semantics<parallel>], iteration_bounds = array<i64: 1>, scalar_prefetch = 0 : i64, scratch_operands = 0 : i64, tpu.core_type = #tpu.core_type<tc>, window_params = [{transform_indices = @transform_0, window_bounds = array<i64: 128, 128>}, {transform_indices = @transform_1, window_bounds = array<i64: 128, 128>}, {transform_indices = @transform_2, window_bounds = array<i64: 128, 128>}, {transform_indices = @transform_3, window_bounds = array<i64: 128, 128>}, {transform_indices = @transform_4, window_bounds = array<i64: 1, 8, 128>}]} {
    %c128_i32 = arith.constant 128 : i32
    %0 = arith.muli %arg0, %c128_i32 : i32
    %cst = arith.constant 0.000000e+00 : f32
    %1 = vector.broadcast %cst : f32 to vector<8x128xf32>
    %c0_i32 = arith.constant 0 : i32
    %c128_i32_0 = arith.constant 128 : i32
    %2 = arith.muli %c0_i32, %c128_i32_0 : i32
    %3 = tpu.assume_multiple %2, 128 : i32
    %4 = arith.index_cast %3 : i32 to index
    %c0 = arith.constant 0 : index
    %5 = vector.load %arg1[%4, %c0] : memref<128x128xf32, #tpu.memory_space<vmem>>, vector<128x128xf32>
    %6 = arith.index_cast %3 : i32 to index
    %c0_1 = arith.constant 0 : index
    %7 = vector.load %arg2[%6, %c0_1] : memref<128x128xf32, #tpu.memory_space<vmem>>, vector<128x128xf32>
    %8 = arith.index_cast %3 : i32 to index
    %c0_2 = arith.constant 0 : index
    %9 = vector.load %arg3[%8, %c0_2] : memref<128x128xf32, #tpu.memory_space<vmem>>, vector<128x128xf32>
    %10 = arith.index_cast %3 : i32 to index
    %c0_3 = arith.constant 0 : index
    %11 = vector.load %arg4[%10, %c0_3] : memref<128x128xf32, #tpu.memory_space<vmem>>, vector<128x128xf32>
    %12 = arith.subf %5, %7 : vector<128x128xf32>
    %13 = arith.subf %7, %9 : vector<128x128xf32>
    %14 = arith.subf %9, %11 : vector<128x128xf32>
    %15 = arith.subf %11, %5 : vector<128x128xf32>
    %16 = arith.mulf %12, %12 : vector<128x128xf32>
    %17 = arith.mulf %13, %13 : vector<128x128xf32>
    %18 = arith.addf %16, %17 : vector<128x128xf32>
    %19 = arith.mulf %14, %14 : vector<128x128xf32>
    %20 = arith.addf %18, %19 : vector<128x128xf32>
    %21 = arith.mulf %15, %15 : vector<128x128xf32>
    %22 = arith.addf %20, %21 : vector<128x128xf32>
    %c128_i32_4 = arith.constant 128 : i32
    %23 = arith.muli %c0_i32, %c128_i32_4 : i32
    %24 = arith.addi %0, %23 : i32
    %25 = tpu.iota {dimensions = array<i32: 0>} : vector<128x128xi32>
    %26 = vector.broadcast %24 : i32 to vector<128x128xi32>
    %27 = arith.addi %26, %25 : vector<128x128xi32>
    %c16_i32 = arith.constant 16 : i32
    %28 = vector.broadcast %c16_i32 : i32 to vector<128x128xi32>
    %29 = arith.cmpi slt, %27, %28 : vector<128x128xi32>
    %cst_5 = arith.constant 0.000000e+00 : f32
    %30 = vector.broadcast %cst_5 : f32 to vector<128x128xf32>
    %31 = arith.select %29, %22, %30 : vector<128x128xi1>, vector<128x128xf32>
    %32 = vector.shape_cast %31 : vector<128x128xf32> to vector<16x8x128xf32>
    %cst_6 = arith.constant dense<0.000000e+00> : vector<8x128xf32>
    %33 = vector.multi_reduction <add>, %32, %cst_6 [0] : vector<16x8x128xf32> to vector<8x128xf32>
    %34 = arith.addf %1, %33 : vector<8x128xf32>
    %c1_i32 = arith.constant 1 : i32
    %35 = vector.shape_cast %34 : vector<8x128xf32> to vector<1x8x128xf32>
    %c0_7 = arith.constant 0 : index
    %c0_8 = arith.constant 0 : index
    %c0_9 = arith.constant 0 : index
    %36 = vector.load %arg5[%c0_7, %c0_8, %c0_9] : memref<1x8x128xf32, #tpu.memory_space<vmem>>, vector<1x8x128xf32>
    tpu.vector_store %arg5[%c0_7, %c0_8, %c0_9], %35 {strides = array<i32>} : memref<1x8x128xf32, #tpu.memory_space<vmem>>, vector<1x8x128xf32>,
    return
  }
  func.func @transform_0(%arg0: i32) -> (i32, i32) {
    %c0_i32 = arith.constant 0 : i32
    %c0_i32_0 = arith.constant 0 : i32
    return %arg0, %c0_i32 : i32, i32
  }
  func.func @transform_1(%arg0: i32) -> (i32, i32) {
    %c0_i32 = arith.constant 0 : i32
    %c0_i32_0 = arith.constant 0 : i32
    return %arg0, %c0_i32 : i32, i32
  }
  func.func @transform_2(%arg0: i32) -> (i32, i32) {
    %c0_i32 = arith.constant 0 : i32
    %c0_i32_0 = arith.constant 0 : i32
    return %arg0, %c0_i32 : i32, i32
  }
  func.func @transform_3(%arg0: i32) -> (i32, i32) {
    %c0_i32 = arith.constant 0 : i32
    %c0_i32_0 = arith.constant 0 : i32
    return %arg0, %c0_i32 : i32, i32
  }
  func.func @transform_4(%arg0: i32) -> (i32, i32, i32) {
    %c0_i32 = arith.constant 0 : i32
    %c0_i32_0 = arith.constant 0 : i32
    %c0_i32_1 = arith.constant 0 : i32
    return %arg0, %c0_i32, %c0_i32_0 : i32, i32, i32
  }
}

</mosaic_0001>

<llo_original>
// kernel: tpu_custom_call.1
$region0: #{tpu_custom_call.1}
  #allocation0 [shape = 'u32[]', space=smem, size = 0x4, offset = 0x4, fixed_abs, tag = 'smem constant byte address 0x4 - core index']
  #allocation1 [shape = 'u32[144,128]{1,0:T(1,128)}', space=vmem, size = 0x12000, scoped, tag = 'internal scratch']
  %s0 = inlined_call_operand.hbm [shape: f32[16,128], index: 0, kind: input, shape index: {}]
  %s1 = inlined_call_operand.hbm [shape: f32[16,128], index: 1, kind: input, shape index: {}]
  %s2 = inlined_call_operand.hbm [shape: f32[16,128], index: 2, kind: input, shape index: {}]
  %s3 = inlined_call_operand.hbm [shape: f32[16,128], index: 3, kind: input, shape index: {}]
  %s4 = inlined_call_operand.hbm [shape: f32[1,8,128], index: 4, kind: output, shape index: {}]
  %s5 = sld [smem:[#allocation0]]
  $region42: #{tpu_custom_call.1} parent=0
    _
  %s7 = ssub.s32 1, %s5
  %s8 = scalar_select 0, %s7, %s5
  $region1: #{tpu_custom_call.1} parent=0
    #allocation2 [shape = 'u8[65536]{0}', space=vmem, size = 0x10000, scoped, tag = 'input window, operand 0, single buffered']
    #allocation3 [shape = 's32[1]{0}', space=sflag, size = 0x4, scoped, tag = 'scoped memory for tpu_custom_call.1']
    #allocation4 [shape = 's32[1]{0}', space=sflag, size = 0x4, scoped, tag = 'scoped memory for tpu_custom_call.1']
    #allocation5 [shape = 'u8[65536]{0}', space=vmem, size = 0x10000, scoped, tag = 'input window, operand 1, single buffered']
    #allocation6 [shape = 's32[1]{0}', space=sflag, size = 0x4, scoped, tag = 'scoped memory for tpu_custom_call.1']
    #allocation7 [shape = 'u8[65536]{0}', space=vmem, size = 0x10000, scoped, tag = 'input window, operand 2, single buffered']
    #allocation8 [shape = 'u8[65536]{0}', space=vmem, size = 0x10000, scoped, tag = 'input window, operand 3, single buffered']
    #allocation9 [shape = 's32[1]{0}', space=sflag, size = 0x4, scoped, tag = 'scoped memory for tpu_custom_call.1']
    #allocation10 [shape = 'u8[4096]{0}', space=vmem, size = 0x1000, scoped, tag = 'output window, operand 0, single buffered']
    %9 = vsyncpa [#allocation3], 0
    %10 = vsyncpa [#allocation6], 0
    %11 = vsyncpa [#allocation9], 0
    %12 = vsyncpa [#allocation4], 0
    // Predicated region
    $region2: #{tpu_custom_call.1} parent=1 // pred_check
      _
    $region3: #{tpu_custom_call.1} parent=1 // pred_check_branch
      %14 = sbr.rel (0) target = $region5
    $region4: #{tpu_custom_call.1} parent=1 // pred_region
      %s16 = ssub.s32 2048, 256
      %17 = vsyncadd [#allocation3], %s16
      %s18 = sshll.u32 [#allocation2], 4
      %s19 = int_to_ptr.vmem [resolvable:$true] %s18
      %24 = dma.hbm_to_vmem [thread:$0]  %s0, 256, %s19, [#allocation3], 128, 128, 8
    $region5: #{tpu_custom_call.1} parent=1 // pred_fallthru
      _
    // Predicated region
    $region6: #{tpu_custom_call.1} parent=1 // pred_check
      _
    $region7: #{tpu_custom_call.1} parent=1 // pred_check_branch
      %26 = sbr.rel (0) target = $region9
    $region8: #{tpu_custom_call.1} parent=1 // pred_region
      %s28 = ssub.s32 2048, 256
      %29 = vsyncadd [#allocation6], %s28
      %s30 = sshll.u32 [#allocation5], 4
      %s31 = int_to_ptr.vmem [resolvable:$true] %s30
      %36 = dma.hbm_to_vmem [thread:$0]  %s1, 256, %s31, [#allocation6], 128, 128, 8
    $region9: #{tpu_custom_call.1} parent=1 // pred_fallthru
      _
    // Predicated region
    $region10: #{tpu_custom_call.1} parent=1 // pred_check
      _
    $region11: #{tpu_custom_call.1} parent=1 // pred_check_branch
      %38 = sbr.rel (0) target = $region13
    $region12: #{tpu_custom_call.1} parent=1 // pred_region
      %s40 = ssub.s32 2048, 256
      %41 = vsyncadd [#allocation6], %s40
      %s42 = sshll.u32 [#allocation7], 4
      %s43 = int_to_ptr.vmem [resolvable:$true] %s42
      %48 = dma.hbm_to_vmem [thread:$0]  %s2, 256, %s43, [#allocation6], 128, 128, 8
    $region13: #{tpu_custom_call.1} parent=1 // pred_fallthru
      _
    // Predicated region
    $region14: #{tpu_custom_call.1} parent=1 // pred_check
      _
    $region15: #{tpu_custom_call.1} parent=1 // pred_check_branch
      %50 = sbr.rel (0) target = $region17
    $region16: #{tpu_custom_call.1} parent=1 // pred_region
      %s52 = ssub.s32 2048, 256
      %53 = vsyncadd [#allocation9], %s52
      %s54 = sshll.u32 [#allocation8], 4
      %s55 = int_to_ptr.vmem [resolvable:$true] %s54
      %60 = dma.hbm_to_vmem [thread:$0]  %s3, 256, %s55, [#allocation9], 128, 128, 8
    $region17: #{tpu_custom_call.1} parent=1 // pred_fallthru
      _
    // Predicated region
    $region18: #{tpu_custom_call.1} parent=1 // pred_check
      _
    $region19: #{tpu_custom_call.1} parent=1 // pred_check_branch
      %62 = sbr.rel (0) target = $region21
    $region20: #{tpu_custom_call.1} parent=1 // pred_region
      %63 = dma.done [#allocation3], 2048
    $region21: #{tpu_custom_call.1} parent=1 // pred_fallthru
      _
    // Predicated region
    $region22: #{tpu_custom_call.1} parent=1 // pred_check
      _
    $region23: #{tpu_custom_call.1} parent=1 // pred_check_branch
      %65 = sbr.rel (0) target = $region25
    $region24: #{tpu_custom_call.1} parent=1 // pred_region
      %66 = dma.done [#allocation6], 2048
    $region25: #{tpu_custom_call.1} parent=1 // pred_fallthru
      _
    // Predicated region
    $region26: #{tpu_custom_call.1} parent=1 // pred_check
      _
    $region27: #{tpu_custom_call.1} parent=1 // pred_check_branch
      %68 = sbr.rel (0) target = $region29
    $region28: #{tpu_custom_call.1} parent=1 // pred_region
      %69 = dma.done [#allocation6], 2048
    $region29: #{tpu_custom_call.1} parent=1 // pred_fallthru
      _
    // Predicated region
    $region30: #{tpu_custom_call.1} parent=1 // pred_check
      _
    $region31: #{tpu_custom_call.1} parent=1 // pred_check_branch
      %71 = sbr.rel (0) target = $region33
    $region32: #{tpu_custom_call.1} parent=1 // pred_region
      %72 = dma.done [#allocation9], 2048
    $region33: #{tpu_custom_call.1} parent=1 // pred_fallthru
      _
    %s73 = smul.u32 0, 128
    %v74 = vld [vmem:[#allocation2] sm:$0xff]
    %v75 = vld [vmem:[#allocation2 + $0x8] sm:$0xff]
    %v76 = vld [vmem:[#allocation2 + $0x10] sm:$0xff]
    %v77 = vld [vmem:[#allocation2 + $0x18] sm:$0xff]
    %v78 = vld [vmem:[#allocation2 + $0x20] sm:$0xff]
    %v79 = vld [vmem:[#allocation2 + $0x28] sm:$0xff]
    %v80 = vld [vmem:[#allocation2 + $0x30] sm:$0xff]
    %v81 = vld [vmem:[#allocation2 + $0x38] sm:$0xff]
    %v82 = vld [vmem:[#allocation2 + $0x40] sm:$0xff]
    %v83 = vld [vmem:[#allocation2 + $0x48] sm:$0xff]
    %v84 = vld [vmem:[#allocation2 + $0x50] sm:$0xff]
    %v85 = vld [vmem:[#allocation2 + $0x58] sm:$0xff]
    %v86 = vld [vmem:[#allocation2 + $0x60] sm:$0xff]
    %v87 = vld [vmem:[#allocation2 + $0x68] sm:$0xff]
    %v88 = vld [vmem:[#allocation2 + $0x70] sm:$0xff]
    %v89 = vld [vmem:[#allocation2 + $0x78] sm:$0xff]
    %v90 = vld [vmem:[#allocation5] sm:$0xff]
    %v91 = vld [vmem:[#allocation5 + $0x8] sm:$0xff]
    %v92 = vld [vmem:[#allocation5 + $0x10] sm:$0xff]
    %v93 = vld [vmem:[#allocation5 + $0x18] sm:$0xff]
    %v94 = vld [vmem:[#allocation5 + $0x20] sm:$0xff]
    %v95 = vld [vmem:[#allocation5 + $0x28] sm:$0xff]
    %v96 = vld [vmem:[#allocation5 + $0x30] sm:$0xff]
    %v97 = vld [vmem:[#allocation5 + $0x38] sm:$0xff]
    %v98 = vld [vmem:[#allocation5 + $0x40] sm:$0xff]
    %v99 = vld [vmem:[#allocation5 + $0x48] sm:$0xff]
    %v100 = vld [vmem:[#allocation5 + $0x50] sm:$0xff]
    %v101 = vld [vmem:[#allocation5 + $0x58] sm:$0xff]
    %v102 = vld [vmem:[#allocation5 + $0x60] sm:$0xff]
    %v103 = vld [vmem:[#allocation5 + $0x68] sm:$0xff]
    %v104 = vld [vmem:[#allocation5 + $0x70] sm:$0xff]
    %v105 = vld [vmem:[#allocation5 + $0x78] sm:$0xff]
    %v106 = vld [vmem:[#allocation7] sm:$0xff]
    %v107 = vld [vmem:[#allocation7 + $0x8] sm:$0xff]
    %v108 = vld [vmem:[#allocation7 + $0x10] sm:$0xff]
    %v109 = vld [vmem:[#allocation7 + $0x18] sm:$0xff]
    %v110 = vld [vmem:[#allocation7 + $0x20] sm:$0xff]
    %v111 = vld [vmem:[#allocation7 + $0x28] sm:$0xff]
    %v112 = vld [vmem:[#allocation7 + $0x30] sm:$0xff]
    %v113 = vld [vmem:[#allocation7 + $0x38] sm:$0xff]
    %v114 = vld [vmem:[#allocation7 + $0x40] sm:$0xff]
    %v115 = vld [vmem:[#allocation7 + $0x48] sm:$0xff]
    %v116 = vld [vmem:[#allocation7 + $0x50] sm:$0xff]
    %v117 = vld [vmem:[#allocation7 + $0x58] sm:$0xff]
    %v118 = vld [vmem:[#allocation7 + $0x60] sm:$0xff]
    %v119 = vld [vmem:[#allocation7 + $0x68] sm:$0xff]
    %v120 = vld [vmem:[#allocation7 + $0x70] sm:$0xff]
    %v121 = vld [vmem:[#allocation7 + $0x78] sm:$0xff]
    %v122 = vld [vmem:[#allocation8] sm:$0xff]
    %v123 = vld [vmem:[#allocation8 + $0x8] sm:$0xff]
    %v124 = vld [vmem:[#allocation8 + $0x10] sm:$0xff]
    %v125 = vld [vmem:[#allocation8 + $0x18] sm:$0xff]
    %v126 = vld [vmem:[#allocation8 + $0x20] sm:$0xff]
    %v127 = vld [vmem:[#allocation8 + $0x28] sm:$0xff]
    %v128 = vld [vmem:[#allocation8 + $0x30] sm:$0xff]
    %v129 = vld [vmem:[#allocation8 + $0x38] sm:$0xff]
    %v130 = vld [vmem:[#allocation8 + $0x40] sm:$0xff]
    %v131 = vld [vmem:[#allocation8 + $0x48] sm:$0xff]
    %v132 = vld [vmem:[#allocation8 + $0x50] sm:$0xff]
    %v133 = vld [vmem:[#allocation8 + $0x58] sm:$0xff]
    %v134 = vld [vmem:[#allocation8 + $0x60] sm:$0xff]
    %v135 = vld [vmem:[#allocation8 + $0x68] sm:$0xff]
    %v136 = vld [vmem:[#allocation8 + $0x70] sm:$0xff]
    %v137 = vld [vmem:[#allocation8 + $0x78] sm:$0xff]
    %v138 = vsub.f32 %v74, %v90
    %v139 = vsub.f32 %v75, %v91
    %v140 = vsub.f32 %v76, %v92
    %v141 = vsub.f32 %v77, %v93
    %v142 = vsub.f32 %v78, %v94
    %v143 = vsub.f32 %v79, %v95
    %v144 = vsub.f32 %v80, %v96
    %v145 = vsub.f32 %v81, %v97
    %v146 = vsub.f32 %v82, %v98
    %v147 = vsub.f32 %v83, %v99
    %v148 = vsub.f32 %v84, %v100
    %v149 = vsub.f32 %v85, %v101
    %v150 = vsub.f32 %v86, %v102
    %v151 = vsub.f32 %v87, %v103
    %v152 = vsub.f32 %v88, %v104
    %v153 = vsub.f32 %v89, %v105
    %v154 = vsub.f32 %v90, %v106
    %v155 = vsub.f32 %v91, %v107
    %v156 = vsub.f32 %v92, %v108
    %v157 = vsub.f32 %v93, %v109
    %v158 = vsub.f32 %v94, %v110
    %v159 = vsub.f32 %v95, %v111
    %v160 = vsub.f32 %v96, %v112
    %v161 = vsub.f32 %v97, %v113
    %v162 = vsub.f32 %v98, %v114
    %v163 = vsub.f32 %v99, %v115
    %v164 = vsub.f32 %v100, %v116
    %v165 = vsub.f32 %v101, %v117
    %v166 = vsub.f32 %v102, %v118
    %v167 = vsub.f32 %v103, %v119
    %v168 = vsub.f32 %v104, %v120
    %v169 = vsub.f32 %v105, %v121
    %v170 = vsub.f32 %v106, %v122
    %v171 = vsub.f32 %v107, %v123
    %v172 = vsub.f32 %v108, %v124
    %v173 = vsub.f32 %v109, %v125
    %v174 = vsub.f32 %v110, %v126
    %v175 = vsub.f32 %v111, %v127
    %v176 = vsub.f32 %v112, %v128
    %v177 = vsub.f32 %v113, %v129
    %v178 = vsub.f32 %v114, %v130
    %v179 = vsub.f32 %v115, %v131
    %v180 = vsub.f32 %v116, %v132
    %v181 = vsub.f32 %v117, %v133
    %v182 = vsub.f32 %v118, %v134
    %v183 = vsub.f32 %v119, %v135
    %v184 = vsub.f32 %v120, %v136
    %v185 = vsub.f32 %v121, %v137
    %v186 = vsub.f32 %v122, %v74
    %v187 = vsub.f32 %v123, %v75
    %v188 = vsub.f32 %v124, %v76
    %v189 = vsub.f32 %v125, %v77
    %v190 = vsub.f32 %v126, %v78
    %v191 = vsub.f32 %v127, %v79
    %v192 = vsub.f32 %v128, %v80
    %v193 = vsub.f32 %v129, %v81
    %v194 = vsub.f32 %v130, %v82
    %v195 = vsub.f32 %v131, %v83
    %v196 = vsub.f32 %v132, %v84
    %v197 = vsub.f32 %v133, %v85
    %v198 = vsub.f32 %v134, %v86
    %v199 = vsub.f32 %v135, %v87
    %v200 = vsub.f32 %v136, %v88
    %v201 = vsub.f32 %v137, %v89
    %v202 = vmul.f32 %v138, %v138
    %v203 = vmul.f32 %v139, %v139
    %v204 = vmul.f32 %v140, %v140
    %v205 = vmul.f32 %v141, %v141
    %v206 = vmul.f32 %v142, %v142
    %v207 = vmul.f32 %v143, %v143
    %v208 = vmul.f32 %v144, %v144
    %v209 = vmul.f32 %v145, %v145
    %v210 = vmul.f32 %v146, %v146
    %v211 = vmul.f32 %v147, %v147
    %v212 = vmul.f32 %v148, %v148
    %v213 = vmul.f32 %v149, %v149
    %v214 = vmul.f32 %v150, %v150
    %v215 = vmul.f32 %v151, %v151
    %v216 = vmul.f32 %v152, %v152
    %v217 = vmul.f32 %v153, %v153
    %v218 = vmul.f32 %v154, %v154
    %v219 = vmul.f32 %v155, %v155
    %v220 = vmul.f32 %v156, %v156
    %v221 = vmul.f32 %v157, %v157
    %v222 = vmul.f32 %v158, %v158
    %v223 = vmul.f32 %v159, %v159
    %v224 = vmul.f32 %v160, %v160
    %v225 = vmul.f32 %v161, %v161
    %v226 = vmul.f32 %v162, %v162
    %v227 = vmul.f32 %v163, %v163
    %v228 = vmul.f32 %v164, %v164
    %v229 = vmul.f32 %v165, %v165
    %v230 = vmul.f32 %v166, %v166
    %v231 = vmul.f32 %v167, %v167
    %v232 = vmul.f32 %v168, %v168
    %v233 = vmul.f32 %v169, %v169
    %v234 = vadd.f32 %v202, %v218
    %v235 = vadd.f32 %v203, %v219
    %v236 = vadd.f32 %v204, %v220
    %v237 = vadd.f32 %v205, %v221
    %v238 = vadd.f32 %v206, %v222
    %v239 = vadd.f32 %v207, %v223
    %v240 = vadd.f32 %v208, %v224
    %v241 = vadd.f32 %v209, %v225
    %v242 = vadd.f32 %v210, %v226
    %v243 = vadd.f32 %v211, %v227
    %v244 = vadd.f32 %v212, %v228
    %v245 = vadd.f32 %v213, %v229
    %v246 = vadd.f32 %v214, %v230
    %v247 = vadd.f32 %v215, %v231
    %v248 = vadd.f32 %v216, %v232
    %v249 = vadd.f32 %v217, %v233
    %v250 = vmul.f32 %v170, %v170
    %v251 = vmul.f32 %v171, %v171
    %v252 = vmul.f32 %v172, %v172
    %v253 = vmul.f32 %v173, %v173
    %v254 = vmul.f32 %v174, %v174
    %v255 = vmul.f32 %v175, %v175
    %v256 = vmul.f32 %v176, %v176
    %v257 = vmul.f32 %v177, %v177
    %v258 = vmul.f32 %v178, %v178
    %v259 = vmul.f32 %v179, %v179
    %v260 = vmul.f32 %v180, %v180
    %v261 = vmul.f32 %v181, %v181
    %v262 = vmul.f32 %v182, %v182
    %v263 = vmul.f32 %v183, %v183
    %v264 = vmul.f32 %v184, %v184
    %v265 = vmul.f32 %v185, %v185
    %v266 = vadd.f32 %v234, %v250
    %v267 = vadd.f32 %v235, %v251
    %v268 = vadd.f32 %v236, %v252
    %v269 = vadd.f32 %v237, %v253
    %v270 = vadd.f32 %v238, %v254
    %v271 = vadd.f32 %v239, %v255
    %v272 = vadd.f32 %v240, %v256
    %v273 = vadd.f32 %v241, %v257
    %v274 = vadd.f32 %v242, %v258
    %v275 = vadd.f32 %v243, %v259
    %v276 = vadd.f32 %v244, %v260
    %v277 = vadd.f32 %v245, %v261
    %v278 = vadd.f32 %v246, %v262
    %v279 = vadd.f32 %v247, %v263
    %v280 = vadd.f32 %v248, %v264
    %v281 = vadd.f32 %v249, %v265
    %v282 = vmul.f32 %v186, %v186
    %v283 = vmul.f32 %v187, %v187
    %v284 = vmul.f32 %v188, %v188
    %v285 = vmul.f32 %v189, %v189
    %v286 = vmul.f32 %v190, %v190
    %v287 = vmul.f32 %v191, %v191
    %v288 = vmul.f32 %v192, %v192
    %v289 = vmul.f32 %v193, %v193
    %v290 = vmul.f32 %v194, %v194
    %v291 = vmul.f32 %v195, %v195
    %v292 = vmul.f32 %v196, %v196
    %v293 = vmul.f32 %v197, %v197
    %v294 = vmul.f32 %v198, %v198
    %v295 = vmul.f32 %v199, %v199
    %v296 = vmul.f32 %v200, %v200
    %v297 = vmul.f32 %v201, %v201
    %v298 = vadd.f32 %v266, %v282
    %v299 = vadd.f32 %v267, %v283
    %v300 = vadd.f32 %v268, %v284
    %v301 = vadd.f32 %v269, %v285
    %v302 = vadd.f32 %v270, %v286
    %v303 = vadd.f32 %v271, %v287
    %v304 = vadd.f32 %v272, %v288
    %v305 = vadd.f32 %v273, %v289
    %v306 = vadd.f32 %v274, %v290
    %v307 = vadd.f32 %v275, %v291
    %v308 = vadd.f32 %v276, %v292
    %v309 = vadd.f32 %v277, %v293
    %v310 = vadd.f32 %v278, %v294
    %v311 = vadd.f32 %v279, %v295
    %v312 = vadd.f32 %v280, %v296
    %v313 = vadd.f32 %v281, %v297
    %v314 = vlaneseq
    %v315 = vshrl.u32 %v314, 7
    %v316 = vadd.s32 %v315, 8
    %v317 = vadd.s32 %v315, 16
    %v318 = vadd.s32 %v315, 24
    %v319 = vadd.s32 %v315, 32
    %v320 = vadd.s32 %v315, 40
    %v321 = vadd.s32 %v315, 48
    %v322 = vadd.s32 %v315, 56
    %v323 = vadd.s32 %v315, 64
    %v324 = vadd.s32 %v315, 72
    %v325 = vadd.s32 %v315, 80
    %v326 = vadd.s32 %v315, 88
    %v327 = vadd.s32 %v315, 96
    %v328 = vadd.s32 %v315, 104
    %v329 = vadd.s32 %v315, 112
    %v330 = vadd.s32 %v315, 120
    %v331 = vstv %s73
    %v332 = vadd.s32 %v331, %v315
    %v333 = vadd.s32 %v331, %v316
    %v334 = vadd.s32 %v331, %v317
    %v335 = vadd.s32 %v331, %v318
    %v336 = vadd.s32 %v331, %v319
    %v337 = vadd.s32 %v331, %v320
    %v338 = vadd.s32 %v331, %v321
    %v339 = vadd.s32 %v331, %v322
    %v340 = vadd.s32 %v331, %v323
    %v341 = vadd.s32 %v331, %v324
    %v342 = vadd.s32 %v331, %v325
    %v343 = vadd.s32 %v331, %v326
    %v344 = vadd.s32 %v331, %v327
    %v345 = vadd.s32 %v331, %v328
    %v346 = vadd.s32 %v331, %v329
    %v347 = vadd.s32 %v331, %v330
    %vm348 = vcmp.lt.s32.totalorder %v332, 16
    %vm349 = vcmp.lt.s32.totalorder %v333, 16
    %vm350 = vcmp.lt.s32.totalorder %v334, 16
    %vm351 = vcmp.lt.s32.totalorder %v335, 16
    %vm352 = vcmp.lt.s32.totalorder %v336, 16
    %vm353 = vcmp.lt.s32.totalorder %v337, 16
    %vm354 = vcmp.lt.s32.totalorder %v338, 16
    %vm355 = vcmp.lt.s32.totalorder %v339, 16
    %vm356 = vcmp.lt.s32.totalorder %v340, 16
    %vm357 = vcmp.lt.s32.totalorder %v341, 16
    %vm358 = vcmp.lt.s32.totalorder %v342, 16
    %vm359 = vcmp.lt.s32.totalorder %v343, 16
    %vm360 = vcmp.lt.s32.totalorder %v344, 16
    %vm361 = vcmp.lt.s32.totalorder %v345, 16
    %vm362 = vcmp.lt.s32.totalorder %v346, 16
    %vm363 = vcmp.lt.s32.totalorder %v347, 16
    %v364 = vsel %vm348, %v298, 0.0
    %v365 = vsel %vm349, %v299, 0.0
    %v366 = vsel %vm350, %v300, 0.0
    %v367 = vsel %vm351, %v301, 0.0
    %v368 = vsel %vm352, %v302, 0.0
    %v369 = vsel %vm353, %v303, 0.0
    %v370 = vsel %vm354, %v304, 0.0
    %v371 = vsel %vm355, %v305, 0.0
    %v372 = vsel %vm356, %v306, 0.0
    %v373 = vsel %vm357, %v307, 0.0
    %v374 = vsel %vm358, %v308, 0.0
    %v375 = vsel %vm359, %v309, 0.0
    %v376 = vsel %vm360, %v310, 0.0
    %v377 = vsel %vm361, %v311, 0.0
    %v378 = vsel %vm362, %v312, 0.0
    %v379 = vsel %vm363, %v313, 0.0
    %v380 = vadd.f32 %v364, %v365
    %v381 = vadd.f32 %v380, %v366
    %v382 = vadd.f32 %v381, %v367
    %v383 = vadd.f32 %v382, %v368
    %v384 = vadd.f32 %v383, %v369
    %v385 = vadd.f32 %v384, %v370
    %v386 = vadd.f32 %v385, %v371
    %v387 = vadd.f32 %v386, %v372
    %v388 = vadd.f32 %v387, %v373
    %v389 = vadd.f32 %v388, %v374
    %v390 = vadd.f32 %v389, %v375
    %v391 = vadd.f32 %v390, %v376
    %v392 = vadd.f32 %v391, %v377
    %v393 = vadd.f32 %v392, %v378
    %v394 = vadd.f32 %v393, %v379
    %v395 = vadd.f32 %v394, 0.0
    %396 = vst [vmem:[#allocation10] sm:$0xff] %v395
    // Predicated region
    $region34: #{tpu_custom_call.1} parent=1 // pred_check
      _
    $region35: #{tpu_custom_call.1} parent=1 // pred_check_branch
      %398 = sbr.rel (0) target = $region37
    $region36: #{tpu_custom_call.1} parent=1 // pred_region
      %s400 = ssub.s32 128, 128
      %401 = vsyncadd [#allocation4], %s400
      %s403 = sshll.u32 [#allocation10], 4
      %s404 = int_to_ptr.vmem [resolvable:$true] %s403
      %406 = dma.vmem_to_hbm [thread:$0]  %s404, 128, %s4, [#allocation4]
    $region37: #{tpu_custom_call.1} parent=1 // pred_fallthru
      _
    // Predicated region
    $region38: #{tpu_custom_call.1} parent=1 // pred_check
      _
    $region39: #{tpu_custom_call.1} parent=1 // pred_check_branch
      %408 = sbr.rel (0) target = $region41
    $region40: #{tpu_custom_call.1} parent=1 // pred_region
      %409 = dma.done [#allocation4], 128
    $region41: #{tpu_custom_call.1} parent=1 // pred_fallthru
      _
    %410 = vsyncpa [#allocation3], 1
    %411 = vsyncpa [#allocation6], 1
    %412 = vsyncpa [#allocation9], 1
    %413 = vsyncpa [#allocation4], 1

</llo_original>
